<compile_context>
chip_gen: v6e
topology: v6e:2x2x1
jax: 0.10.0
libtpu: 0.0.40
codegen_flags: <defaults>
</compile_context>

<pallas_src>
import functools

import numpy as np
import jax
import jax.numpy as jnp
from jax.experimental import pallas as pl
from jax.experimental.pallas import tpu as pltpu

_NEG_BIG = -1e30   # masked-column sentinel (representable in bf16 and f32)


def _uwe_kernel(bias_ref, te_ref, we_ref, m_out_ref, l_out_ref, m_sc, l_sc, *, K):
    v = pl.program_id(1)               # inner (vocab, reduction) axis
    nv = pl.num_programs(1)

    # per-(t, k) online-LSE accumulators, persist across this core's vocab sweep
    @pl.when(v == 0)
    def _():
        m_sc[...] = jnp.full(m_sc.shape, _NEG_BIG, m_sc.dtype)
        l_sc[...] = jnp.zeros(l_sc.shape, l_sc.dtype)

    bias = bias_ref[...].astype(jnp.float32)    # (T, 1, tv): 0 for negatives, -1e30 else
    te = te_ref[...]                            # (T*K, D) bf16, pre-scaled by 1/temperature
    we = we_ref[...]                            # (D, tv)  bf16, vocab on the lane axis
    s = jnp.dot(te, we, preferred_element_type=jnp.float32)   # (T*K, tv) f32
    T = bias.shape[0]
    # layout-free sublane split (K multiple of 8); masked columns absorb to ~ -1e30
    s3 = s.reshape(T, K, s.shape[-1]) + bias                  # (T, K, tv)

    # online masked sum-exp over vocab tiles.
    # NOTE: the running max is never added back (matches ETC's detached max).
    tile_max = jnp.max(s3, axis=-1, keepdims=True)            # (T, K, 1)
    m_new = jnp.maximum(m_sc[...], tile_max)
    alpha = jnp.exp(m_sc[...] - m_new)                        # exponent <= 0 by construction
    p = jnp.exp(s3 - m_new)                                   # masked cols -> 0 (or wiped by alpha)
    l_sc[...] = alpha * l_sc[...] + jnp.sum(p, axis=-1, keepdims=True)
    m_sc[...] = m_new

    @pl.when(v == nv - 1)
    def _():
        m_out_ref[...] = m_sc[...].reshape(1, T, K, 1)
        l_out_ref[...] = l_sc[...].reshape(1, T, K, 1)


def _round_up(x, m):
    return (x + m - 1) // m * m


def _num_core_splits():
    """2 TensorCores per chip on v7x; 1 on v5e/v6e."""
    try:
        kind = jax.devices()[0].device_kind.lower()
    except Exception:
        return 1
    return 2 if ("v7" in kind or "7x" in kind) else 1


def uwe_forward(time_wordcount, beta, topic_embeddings, word_embeddings, *,
                temperature, weight_UWE, neg_topk,
                vocab_tile=8192, num_core_splits=None):
    T, V = time_wordcount.shape
    Tb, K, D = topic_embeddings.shape
    assert Tb == T
    assert beta.shape == (T, K, V)
    assert word_embeddings.shape == (V, D)
    # Keep T*K a multiple of 8 so the (T*K, tv) -> (T, K, tv) reshape stays a
    # layout-free sublane split (true for the shapes this module uses).

    S = _num_core_splits() if num_core_splits is None else int(num_core_splits)
    S = max(1, S)
    inv_temp = float(1.0 / temperature)

    # ---- glue: index-producing ops (top-k, set intersection) stay in JAX ----
    # torch: set(words with zero count at t) ∩ set(per-time top-k words),
    # expressed as a boolean mask over the vocab (max/sum are permutation- and
    # duplicate-invariant, so order of the index set does not matter).
    _, topk_idx = jax.lax.top_k(beta, neg_topk)                  # (T, K, neg_topk)
    topk_idx = topk_idx.reshape(T, K * neg_topk)
    topk_mask = jnp.zeros((T, V), jnp.bool_).at[
        jnp.arange(T)[:, None], topk_idx].set(True)
    neg_mask = jnp.logical_and(time_wordcount == 0, topk_mask)   # (T, V)
    counts = jnp.sum(neg_mask, axis=-1)                          # (T,)

    # ---- layout / dtype prep -------------------------------------------------
    tv = min(int(vocab_tile), _round_up(-(-V // S), 128))        # multiple of 128
    Vp = _round_up(V, S * tv)
    pad = Vp - V
    n_inner = Vp // (S * tv)

    mask_p = jnp.pad(neg_mask, ((0, 0), (0, pad)))               # pad with False
    bias = jnp.where(mask_p, 0.0, _NEG_BIG).astype(jnp.bfloat16).reshape(T, 1, Vp)
    we_t = jnp.pad(word_embeddings.astype(jnp.bfloat16).T, ((0, 0), (0, pad)))
    # fold 1/temperature into the (tiny) bf16 LHS; exact when 1/temp is a power of 2
    te2 = (topic_embeddings.astype(jnp.float32) * inv_temp).astype(
        jnp.bfloat16).reshape(T * K, D)

    kernel = functools.partial(_uwe_kernel, K=K)

    m_parts, l_parts = pl.pallas_call(
        kernel,
        out_shape=(jax.ShapeDtypeStruct((S, T, K, 1), jnp.float32),
                   jax.ShapeDtypeStruct((S, T, K, 1), jnp.float32)),
        grid_spec=pltpu.PrefetchScalarGridSpec(
            num_scalar_prefetch=0,
            grid=(S, n_inner),
            in_specs=[
                pl.BlockSpec((T, 1, tv), lambda s, v: (0, 0, s * n_inner + v)),
                pl.BlockSpec((T * K, D), lambda s, v: (0, 0)),     # resident LHS
                pl.BlockSpec((D, tv), lambda s, v: (0, s * n_inner + v)),
            ],
            out_specs=[
                pl.BlockSpec((1, T, K, 1), lambda s, v: (s, 0, 0, 0)),
                pl.BlockSpec((1, T, K, 1), lambda s, v: (s, 0, 0, 0)),
            ],
            scratch_shapes=[
                pltpu.VMEM((T, K, 1), jnp.float32),   # running max
                pltpu.VMEM((T, K, 1), jnp.float32),   # running sum-exp
            ],
        ),
        compiler_params=pltpu.CompilerParams(
            dimension_semantics=("parallel", "arbitrary")),  # split across TCs, then reduce
    )(bias, te2, we_t)

    # ---- finalize in JAX: merge per-core partial LSE states + weighted mean ----
    m_parts = m_parts[..., 0]                         # (S, T, K)
    l_parts = l_parts[..., 0]                         # (S, T, K)
    m_g = jnp.max(m_parts, axis=0)                    # (T, K) global detached max
    l_g = jnp.sum(l_parts * jnp.exp(m_parts - m_g[None]), axis=0)
    lse = jnp.log(l_g + 1e-12)                        # (T, K) — max never added back
    per_time = jnp.mean(lse, axis=-1)                 # (T,)
    valid = counts > 0
    cnt = jnp.sum(valid.astype(jnp.float32))
    total = jnp.sum(jnp.where(valid, per_time, 0.0))
    return jnp.where(cnt > 0.0, total * weight_UWE / cnt, jnp.float32(0.0))


def uwe_reference(time_wordcount, beta, topic_embeddings, word_embeddings,
                  temperature, weight_UWE, neg_topk):
    """Pure numpy reproduction of the torch forward (for verification)."""
    twc = np.asarray(time_wordcount)
    beta = np.asarray(beta)
    te = np.asarray(topic_embeddings, dtype=np.float32)
    we = np.asarray(word_embeddings, dtype=np.float32)
    T, V = twc.shape
    topk_idx = np.argsort(-beta, axis=-1)[..., :neg_topk].reshape(T, -1)
    loss = 0.0
    cnt = 0.0
    for t in range(T):
        zero_words = set(np.where(twc[t] == 0)[0].tolist())
        neg = sorted(zero_words.intersection(set(topk_idx[t].tolist())))
        if len(neg) == 0:
            continue
        neg_we = we[np.array(neg)]
        s = (te[t] @ neg_we.T) / temperature
        m = s.max(axis=1, keepdims=True)
        e = np.exp(s - m)
        lp = np.log(e.sum(axis=1) + 1e-12)
        loss += lp.mean()
        cnt += 1.0
    if cnt > 0:
        loss *= weight_UWE / cnt
    return np.float32(loss)


if __name__ == "__main__":
    # small shapes consistent with the module's forward
    T, K, V, D = 4, 8, 256, 32
    neg_topk = 16
    temperature = 0.5        # 1/temp is a power of 2 -> bf16 fold is exact
    weight_UWE = 2.0

    key = jax.random.PRNGKey(0)
    k1, k2, k3, k4 = jax.random.split(key, 4)
    time_wordcount = jax.random.randint(k1, (T, V), 0, 3).astype(jnp.float32)
    beta = jax.random.uniform(k2, (T, K, V), dtype=jnp.float32)
    # Embeddings hit the MXU in bf16 (f32 accumulation); quantize test inputs to
    # bf16 so the f32 numpy reference sees identical values.
    topic_embeddings = jax.random.normal(k3, (T, K, D),
                                         dtype=jnp.float32).astype(jnp.bfloat16)
    word_embeddings = jax.random.normal(k4, (V, D),
                                        dtype=jnp.float32).astype(jnp.bfloat16)

    loss = uwe_forward(time_wordcount, beta, topic_embeddings, word_embeddings,
                       temperature=temperature, weight_UWE=weight_UWE,
                       neg_topk=neg_topk)
    loss = jax.block_until_ready(loss)

    ref = uwe_reference(time_wordcount, beta,
                        np.asarray(topic_embeddings.astype(jnp.float32)),
                        np.asarray(word_embeddings.astype(jnp.float32)),
                        temperature, weight_UWE, neg_topk)
    assert np.allclose(np.asarray(loss), ref, rtol=5e-3, atol=5e-3), (loss, ref)
    print("KERNEL_OK")
</pallas_src>

<mosaic_0001>
module attributes {stable_mosaic.version = 11 : i64} {
  func.func @_uwe_kernel(%arg0: i32, %arg1: i32, %arg2: memref<4x1x256xbf16, #tpu.memory_space<vmem>>, %arg3: memref<32x32xbf16, #tpu.memory_space<vmem>>, %arg4: memref<32x256xbf16, #tpu.memory_space<vmem>>, %arg5: memref<1x4x8x1xf32, #tpu.memory_space<vmem>>, %arg6: memref<1x4x8x1xf32, #tpu.memory_space<vmem>>, %arg7: memref<4x8x1xf32, #tpu.memory_space<vmem>>, %arg8: memref<4x8x1xf32, #tpu.memory_space<vmem>>) attributes {dimension_semantics = [#tpu.dimension_semantics<parallel>, #tpu.dimension_semantics<arbitrary>], iteration_bounds = array<i64: 1, 1>, scalar_prefetch = 0 : i64, scratch_operands = 2 : i64, tpu.core_type = #tpu.core_type<tc>, window_params = [{transform_indices = @transform_0, window_bounds = array<i64: 4, 1, 256>}, {pipeline_mode = #tpu.pipeline_mode<synchronous>, transform_indices = @transform_1, window_bounds = array<i64: 32, 32>}, {transform_indices = @transform_2, window_bounds = array<i64: 32, 256>}, {transform_indices = @transform_3, window_bounds = array<i64: 1, 4, 8, 1>}, {transform_indices = @transform_4, window_bounds = array<i64: 1, 4, 8, 1>}]} {
    %c0_i32 = arith.constant 0 : i32
    %0 = arith.cmpi eq, %arg1, %c0_i32 : i32
    %1 = arith.extui %0 : i1 to i32
    %c0_i32_0 = arith.constant 0 : i32
    %2 = arith.cmpi ne, %1, %c0_i32_0 : i32
    scf.if %2 {
      %cst_26 = arith.constant -1.000000e+30 : f32
      %31 = vector.broadcast %cst_26 : f32 to vector<4x8x1xf32>
      %c0_27 = arith.constant 0 : index
      %c0_28 = arith.constant 0 : index
      %c0_29 = arith.constant 0 : index
      %32 = vector.load %arg7[%c0_27, %c0_28, %c0_29] : memref<4x8x1xf32, #tpu.memory_space<vmem>>, vector<4x8x1xf32>
      tpu.vector_store %arg7[%c0_27, %c0_28, %c0_29], %31 {strides = array<i32>} : memref<4x8x1xf32, #tpu.memory_space<vmem>>, vector<4x8x1xf32>,
      %cst_30 = arith.constant 0.000000e+00 : f32
      %33 = vector.broadcast %cst_30 : f32 to vector<4x8x1xf32>
      %c0_31 = arith.constant 0 : index
      %c0_32 = arith.constant 0 : index
      %c0_33 = arith.constant 0 : index
      %34 = vector.load %arg8[%c0_31, %c0_32, %c0_33] : memref<4x8x1xf32, #tpu.memory_space<vmem>>, vector<4x8x1xf32>
      tpu.vector_store %arg8[%c0_31, %c0_32, %c0_33], %33 {strides = array<i32>} : memref<4x8x1xf32, #tpu.memory_space<vmem>>, vector<4x8x1xf32>,
    } else {
    }
    %c0 = arith.constant 0 : index
    %c0_1 = arith.constant 0 : index
    %c0_2 = arith.constant 0 : index
    %3 = vector.load %arg2[%c0, %c0_1, %c0_2] : memref<4x1x256xbf16, #tpu.memory_space<vmem>>, vector<4x1x256xbf16>
    %4 = arith.extf %3 : vector<4x1x256xbf16> to vector<4x1x256xf32>
    %c0_3 = arith.constant 0 : index
    %c0_4 = arith.constant 0 : index
    %5 = vector.load %arg3[%c0_3, %c0_4] : memref<32x32xbf16, #tpu.memory_space<vmem>>, vector<32x32xbf16>
    %c0_5 = arith.constant 0 : index
    %c0_6 = arith.constant 0 : index
    %6 = vector.load %arg4[%c0_5, %c0_6] : memref<32x256xbf16, #tpu.memory_space<vmem>>, vector<32x256xbf16>
    %cst = arith.constant dense<0.000000e+00> : vector<32x256xf32>
    %7 = tpu.matmul %5, %6, %cst {dimension_numbers = #tpu.dot_dimension_numbers<[1], [0], [0], [1], [0, 0, 1, 1], [], []>} : vector<32x32xbf16>, vector<32x256xbf16>, vector<32x256xf32> -> vector<32x256xf32>
    %8 = vector.shape_cast %7 : vector<32x256xf32> to vector<4x8x256xf32>
    %9 = vector.broadcast %4 : vector<4x1x256xf32> to vector<4x8x256xf32>
    %10 = arith.addf %8, %9 : vector<4x8x256xf32>
    %cst_7 = arith.constant dense<0xFF800000> : vector<4x8xf32>
    %11 = vector.multi_reduction <maximumf>, %10, %cst_7 [2] : vector<4x8x256xf32> to vector<4x8xf32>
    %12 = vector.shape_cast %11 : vector<4x8xf32> to vector<4x8x1xf32>
    %c0_8 = arith.constant 0 : index
    %c0_9 = arith.constant 0 : index
    %c0_10 = arith.constant 0 : index
    %13 = vector.load %arg7[%c0_8, %c0_9, %c0_10] : memref<4x8x1xf32, #tpu.memory_space<vmem>>, vector<4x8x1xf32>
    %14 = arith.maximumf %13, %12 : vector<4x8x1xf32>
    %c0_11 = arith.constant 0 : index
    %c0_12 = arith.constant 0 : index
    %c0_13 = arith.constant 0 : index
    %15 = vector.load %arg7[%c0_11, %c0_12, %c0_13] : memref<4x8x1xf32, #tpu.memory_space<vmem>>, vector<4x8x1xf32>
    %16 = arith.subf %15, %14 : vector<4x8x1xf32>
    %17 = math.exp %16 : vector<4x8x1xf32>
    %18 = vector.broadcast %14 : vector<4x8x1xf32> to vector<4x8x256xf32>
    %19 = arith.subf %10, %18 : vector<4x8x256xf32>
    %20 = math.exp %19 : vector<4x8x256xf32>
    %c0_14 = arith.constant 0 : index
    %c0_15 = arith.constant 0 : index
    %c0_16 = arith.constant 0 : index
    %21 = vector.load %arg8[%c0_14, %c0_15, %c0_16] : memref<4x8x1xf32, #tpu.memory_space<vmem>>, vector<4x8x1xf32>
    %22 = arith.mulf %17, %21 : vector<4x8x1xf32>
    %cst_17 = arith.constant dense<0.000000e+00> : vector<4x8xf32>
    %23 = vector.multi_reduction <add>, %20, %cst_17 [2] : vector<4x8x256xf32> to vector<4x8xf32>
    %24 = vector.shape_cast %23 : vector<4x8xf32> to vector<4x8x1xf32>
    %25 = arith.addf %22, %24 : vector<4x8x1xf32>
    %c0_18 = arith.constant 0 : index
    %c0_19 = arith.constant 0 : index
    %c0_20 = arith.constant 0 : index
    %26 = vector.load %arg8[%c0_18, %c0_19, %c0_20] : memref<4x8x1xf32, #tpu.memory_space<vmem>>, vector<4x8x1xf32>
    tpu.vector_store %arg8[%c0_18, %c0_19, %c0_20], %25 {strides = array<i32>} : memref<4x8x1xf32, #tpu.memory_space<vmem>>, vector<4x8x1xf32>,
    %c0_21 = arith.constant 0 : index
    %c0_22 = arith.constant 0 : index
    %c0_23 = arith.constant 0 : index
    %27 = vector.load %arg7[%c0_21, %c0_22, %c0_23] : memref<4x8x1xf32, #tpu.memory_space<vmem>>, vector<4x8x1xf32>
    tpu.vector_store %arg7[%c0_21, %c0_22, %c0_23], %14 {strides = array<i32>} : memref<4x8x1xf32, #tpu.memory_space<vmem>>, vector<4x8x1xf32>,
    %c0_i32_24 = arith.constant 0 : i32
    %28 = arith.cmpi eq, %arg1, %c0_i32_24 : i32
    %29 = arith.extui %28 : i1 to i32
    %c0_i32_25 = arith.constant 0 : i32
    %30 = arith.cmpi ne, %29, %c0_i32_25 : i32
    scf.if %30 {
      %c0_26 = arith.constant 0 : index
      %c0_27 = arith.constant 0 : index
      %c0_28 = arith.constant 0 : index
      %31 = vector.load %arg7[%c0_26, %c0_27, %c0_28] : memref<4x8x1xf32, #tpu.memory_space<vmem>>, vector<4x8x1xf32>
      %32 = vector.shape_cast %31 : vector<4x8x1xf32> to vector<1x4x8x1xf32>
      %c0_29 = arith.constant 0 : index
      %c0_30 = arith.constant 0 : index
      %c0_31 = arith.constant 0 : index
      %c0_32 = arith.constant 0 : index
      %33 = vector.load %arg5[%c0_29, %c0_30, %c0_31, %c0_32] : memref<1x4x8x1xf32, #tpu.memory_space<vmem>>, vector<1x4x8x1xf32>
      tpu.vector_store %arg5[%c0_29, %c0_30, %c0_31, %c0_32], %32 {strides = array<i32>} : memref<1x4x8x1xf32, #tpu.memory_space<vmem>>, vector<1x4x8x1xf32>,
      %c0_33 = arith.constant 0 : index
      %c0_34 = arith.constant 0 : index
      %c0_35 = arith.constant 0 : index
      %34 = vector.load %arg8[%c0_33, %c0_34, %c0_35] : memref<4x8x1xf32, #tpu.memory_space<vmem>>, vector<4x8x1xf32>
      %35 = vector.shape_cast %34 : vector<4x8x1xf32> to vector<1x4x8x1xf32>
      %c0_36 = arith.constant 0 : index
      %c0_37 = arith.constant 0 : index
      %c0_38 = arith.constant 0 : index
      %c0_39 = arith.constant 0 : index
      %36 = vector.load %arg6[%c0_36, %c0_37, %c0_38, %c0_39] : memref<1x4x8x1xf32, #tpu.memory_space<vmem>>, vector<1x4x8x1xf32>
      tpu.vector_store %arg6[%c0_36, %c0_37, %c0_38, %c0_39], %35 {strides = array<i32>} : memref<1x4x8x1xf32, #tpu.memory_space<vmem>>, vector<1x4x8x1xf32>,
    } else {
    }
    return
  }
  func.func @transform_0(%arg0: i32, %arg1: i32) -> (i32, i32, i32) {
    %c1_i32 = arith.constant 1 : i32
    %0 = arith.muli %arg0, %c1_i32 : i32
    %1 = arith.addi %0, %arg1 : i32
    %c0_i32 = arith.constant 0 : i32
    %c0_i32_0 = arith.constant 0 : i32
    %c0_i32_1 = arith.constant 0 : i32
    return %c0_i32, %c0_i32_0, %1 : i32, i32, i32
  }
  func.func @transform_1(%arg0: i32, %arg1: i32) -> (i32, i32) {
    %c0_i32 = arith.constant 0 : i32
    %c0_i32_0 = arith.constant 0 : i32
    %c0_i32_1 = arith.constant 0 : i32
    return %c0_i32, %c0_i32_0 : i32, i32
  }
  func.func @transform_2(%arg0: i32, %arg1: i32) -> (i32, i32) {
    %c1_i32 = arith.constant 1 : i32
    %0 = arith.muli %arg0, %c1_i32 : i32
    %1 = arith.addi %0, %arg1 : i32
    %c0_i32 = arith.constant 0 : i32
    %c0_i32_0 = arith.constant 0 : i32
    return %c0_i32, %1 : i32, i32
  }
  func.func @transform_3(%arg0: i32, %arg1: i32) -> (i32, i32, i32, i32) {
    %c0_i32 = arith.constant 0 : i32
    %c0_i32_0 = arith.constant 0 : i32
    %c0_i32_1 = arith.constant 0 : i32
    %c0_i32_2 = arith.constant 0 : i32
    return %arg0, %c0_i32, %c0_i32_0, %c0_i32_1 : i32, i32, i32, i32
  }
  func.func @transform_4(%arg0: i32, %arg1: i32) -> (i32, i32, i32, i32) {
    %c0_i32 = arith.constant 0 : i32
    %c0_i32_0 = arith.constant 0 : i32
    %c0_i32_1 = arith.constant 0 : i32
    %c0_i32_2 = arith.constant 0 : i32
    return %arg0, %c0_i32, %c0_i32_0, %c0_i32_1 : i32, i32, i32, i32
  }
}

</mosaic_0001>

<llo_original>
// kernel: tpu_custom_call.1
$region0: #{tpu_custom_call.1}
  #allocation0 [shape = 'u32[]', space=smem, size = 0x4, offset = 0x4, fixed_abs, tag = 'smem constant byte address 0x4 - core index']
  #allocation1 [shape = 'u32[144,128]{1,0:T(1,128)}', space=vmem, size = 0x12000, scoped, tag = 'internal scratch']
  #allocation2 [shape = 'f32[4,8,1]{2,1,0:T(8,128)}', space=vmem, size = 0x4000, scoped, tag = 'scratch operand']
  #allocation3 [shape = 'f32[4,8,1]{2,1,0:T(8,128)}', space=vmem, size = 0x4000, scoped, tag = 'scratch operand']
  %s0 = inlined_call_operand.vmem [shape: bf16[4,1,256], index: 0, kind: input, shape index: {}]
  %s1 = inlined_call_operand.hbm [shape: bf16[32,32], index: 1, kind: input, shape index: {}]
  %s2 = inlined_call_operand.hbm [shape: bf16[32,256], index: 2, kind: input, shape index: {}]
  %s3 = inlined_call_operand.vmem [shape: f32[1,4,8,1], index: 3, kind: output, shape index: {0}]
  %s4 = inlined_call_operand.vmem [shape: f32[1,4,8,1], index: 4, kind: output, shape index: {1}]
  %5 = xla_tuple %s3, %s4
  %s6 = sld [smem:[#allocation0]]
  $region46: #{tpu_custom_call.1} parent=0
    _
  %s8 = ssub.s32 1, %s6
  %s9 = scalar_select 0, %s8, %s6
  $region1: #{tpu_custom_call.1} parent=0
    #allocation4 [shape = 'u8[8192]{0}', space=vmem, size = 0x2000, scoped, tag = 'input window, operand 1, single buffered']
    #allocation5 [shape = 's32[1]{0}', space=sflag, size = 0x4, scoped, tag = 'scoped memory for tpu_custom_call.1']
    #allocation6 [shape = 'u8[16384]{0}', space=vmem, size = 0x4000, scoped, tag = 'input window, operand 2, single buffered']
    #allocation7 [shape = 's32[1]{0}', space=sflag, size = 0x4, scoped, tag = 'scoped memory for tpu_custom_call.1']
    %10 = vsyncpa [#allocation5], 0
    %11 = vsyncpa [#allocation7], 0
    // Predicated region
    $region2: #{tpu_custom_call.1} parent=1 // pred_check
      _
    $region3: #{tpu_custom_call.1} parent=1 // pred_check_branch
      %13 = sbr.rel (0) target = $region5
    $region4: #{tpu_custom_call.1} parent=1 // pred_region
      %s14 = sadd.s32 0, 0
      %s15 = smul.u32 2, %s14
      %p16 = scmp.lt.s32.totalorder %s15, 1
      %s17 = scalar_select %p16, %s15, 1
      %s18 = scalar_lea.vmem %s0, %s17
      %s19 = sadd.s32 0, 0
      %s20 = smul.u32 2, %s19
    $region5: #{tpu_custom_call.1} parent=1 // pred_fallthru
      _
    // Predicated region
    $region6: #{tpu_custom_call.1} parent=1 // pred_check
      _
    $region7: #{tpu_custom_call.1} parent=1 // pred_check_branch
      %22 = sbr.rel (0) target = $region9
    $region8: #{tpu_custom_call.1} parent=1 // pred_region
      %s24 = ssub.s32 256, 256
      %25 = vsyncadd [#allocation5], %s24
      %s26 = sshll.u32 [#allocation4], 4
      %s27 = int_to_ptr.vmem [resolvable:$true] %s26
      %32 = dma.hbm_to_vmem [thread:$0]  %s1, 256, %s27, [#allocation5], 64, 64, 4
    $region9: #{tpu_custom_call.1} parent=1 // pred_fallthru
      _
    // Predicated region
    $region10: #{tpu_custom_call.1} parent=1 // pred_check
      _
    $region11: #{tpu_custom_call.1} parent=1 // pred_check_branch
      %34 = sbr.rel (0) target = $region13
    $region12: #{tpu_custom_call.1} parent=1 // pred_region
      %s35 = sadd.s32 0, 0
      %s36 = smul.u32 2, %s35
      %s38 = ssub.s32 512, 512
      %39 = vsyncadd [#allocation7], %s38
      %s40 = smul.addr %s36, 64
      %s41 = scalar_lea.hbm %s2, %s40
      %s42 = sshll.u32 [#allocation6], 4
      %s43 = int_to_ptr.vmem [resolvable:$true] %s42
      %48 = dma.hbm_to_vmem [thread:$0]  %s41, 512, %s43, [#allocation7], 128, 128, 8
    $region13: #{tpu_custom_call.1} parent=1 // pred_fallthru
      _
    // Predicated region
    $region14: #{tpu_custom_call.1} parent=1 // pred_check
      _
    $region15: #{tpu_custom_call.1} parent=1 // pred_check_branch
      %50 = sbr.rel (0) target = $region17
    $region16: #{tpu_custom_call.1} parent=1 // pred_region
      %51 = dma.done [#allocation5], 256
    $region17: #{tpu_custom_call.1} parent=1 // pred_fallthru
      _
    // Predicated region
    $region18: #{tpu_custom_call.1} parent=1 // pred_check
      _
    $region19: #{tpu_custom_call.1} parent=1 // pred_check_branch
      %53 = sbr.rel (0) target = $region21
    $region20: #{tpu_custom_call.1} parent=1 // pred_region
      %54 = dma.done [#allocation7], 512
    $region21: #{tpu_custom_call.1} parent=1 // pred_fallthru
      _
    %s55 = sadd.s32 0, 0
    %s56 = smul.u32 2, %s55
    %p57 = scmp.lt.s32.totalorder %s56, 1
    %s58 = scalar_select %p57, %s56, 1
    %s59 = scalar_lea.vmem %s0, %s58
    %s60 = sadd.s32 0, 0
    %s61 = smul.u32 2, %s60
    %p62 = scmp.lt.s32.totalorder %s61, 1
    %s63 = scalar_select %p62, %s61, 1
    %s64 = scalar_lea.vmem %s0, %s63
    %s65 = sadd.s32 0, 0
    %s66 = smul.u32 2, %s65
    %s67 = sadd.s32 0, 0
    %s68 = smul.u32 2, %s67
    %p70 = scmp.eq.s32.totalorder 0, 0
    // Predicated region
    $region22: #{tpu_custom_call.1} parent=1 // pred_check
      %p71 = pneg %p70
    $region23: #{tpu_custom_call.1} parent=1 // pred_check_branch
      %73 = sbr.rel (%p71) target = $region25
    $region24: #{tpu_custom_call.1} parent=1 // pred_region
      %vm74 = vcmask 7168
      %75 = vst.msk [vmem:[#allocation2] sm:$0xff] %vm74, -1e+30
      %76 = vst.msk [vmem:[#allocation2 + $0x8] sm:$0xff] %vm74, -1e+30
      %77 = vst.msk [vmem:[#allocation2 + $0x10] sm:$0xff] %vm74, -1e+30
      %78 = vst.msk [vmem:[#allocation2 + $0x18] sm:$0xff] %vm74, -1e+30
      %79 = vst.msk [vmem:[#allocation3] sm:$0xff] %vm74, 0.0
      %80 = vst.msk [vmem:[#allocation3 + $0x8] sm:$0xff] %vm74, 0.0
      %81 = vst.msk [vmem:[#allocation3 + $0x10] sm:$0xff] %vm74, 0.0
      %82 = vst.msk [vmem:[#allocation3 + $0x18] sm:$0xff] %vm74, 0.0
    $region25: #{tpu_custom_call.1} parent=1 // pred_fallthru
      _
    %v83 = vld [vmem:[%s64] sm:$0x3]
    %v84 = vld [vmem:[%s64 + $0x2] sm:$0x3]
    %v85 = vld [vmem:[%s64 + $0x4] sm:$0x3]
    %v86 = vld [vmem:[%s64 + $0x6] sm:$0x3]
    %v87 = vunpack.c.l.bf16 %v83
    %v88 = vunpack.c.l.bf16 %v84
    %v89 = vunpack.c.l.bf16 %v85
    %v90 = vunpack.c.l.bf16 %v86
    %v91 = vld [vmem:[#allocation4] sm:$0xf]
    %v92 = vld [vmem:[#allocation4 + $0x4] sm:$0xf]
    %v93 = vld [vmem:[#allocation4 + $0x8] sm:$0xf]
    %v94 = vld [vmem:[#allocation4 + $0xc] sm:$0xf]
    %v95 = vld [vmem:[#allocation6] sm:$0xff]
    %v96 = vld [vmem:[#allocation6 + $0x8] sm:$0xff]
    %v97 = vld [vmem:[#allocation6 + $0x10] sm:$0xff]
    %v98 = vld [vmem:[#allocation6 + $0x18] sm:$0xff]
    %v103 = vunpack.c.l.b16 %v91
    %v104 = vunpack.c.l.b16 %v92
    %v105 = vunpack.c.l.b16 %v93
    %v106 = vunpack.c.l.b16 %v94
    %v107 = vpack.c.b16 %v104, %v103
    %v108 = vpack.c.b16 %v106, %v105
    %v113 = vunpack.c.l.b16 %v95
    %v114 = vunpack.c.h.b16 %v95
    %v115 = vunpack.c.l.b16 %v96
    %v116 = vunpack.c.h.b16 %v96
    %v117 = vunpack.c.l.b16 %v97
    %v118 = vunpack.c.h.b16 %v97
    %v119 = vunpack.c.l.b16 %v98
    %v120 = vunpack.c.h.b16 %v98
    %v121 = vpack.c.b16 %v115, %v113
    %v122 = vpack.c.b16 %v116, %v114
    %v123 = vpack.c.b16 %v119, %v117
    %v124 = vpack.c.b16 %v120, %v118
    %vm129 = vcmask 261120
    %v131 = vsel %vm129, %v107, 0
    %v134 = vsel %vm129, %v108, 0
    %136 = vmatprep.subr.bf16.mxu0 0
    %137 = vmatpush1.bf16.msra.mxu0 0
    %138 = vmatprep.subr.bf16.mxu0 0
    %139 = vmatpush1.bf16.msra.mxu0 0
    %140 = vmatprep.subr.bf16.mxu0 0
    %141 = vmatpush1.bf16.msra.mxu0 0
    %142 = vmatprep.subr.bf16.mxu0 0
    %143 = vmatpush1.bf16.msra.mxu0 0
    %144 = vmatprep.subr.bf16.mxu0 0
    %145 = vmatpush1.bf16.msra.mxu0 0
    %146 = vmatprep.subr.bf16.mxu0 0
    %147 = vmatpush1.bf16.msra.mxu0 0
    %148 = vmatprep.subr.bf16.mxu0 %v124
    %149 = vmatpush1.bf16.msra.mxu0 %v123
    %150 = vmatprep.subr.bf16.mxu0 %v122
    %151 = vmatpush1.bf16.msra.mxu0 %v121
    %152 = vmatprep.subr.bf16.mxu0 0
    %153 = vmatpush2.bf16.msra.mxu0 0
    %154 = vmatprep.subr.bf16.mxu0 0
    %155 = vmatpush2.bf16.msra.mxu0 0
    %156 = vmatprep.subr.bf16.mxu0 0
    %157 = vmatpush2.bf16.msra.mxu0 0
    %158 = vmatprep.subr.bf16.mxu0 0
    %159 = vmatpush2.bf16.msra.mxu0 0
    %160 = vmatprep.subr.bf16.mxu0 0
    %161 = vmatpush2.bf16.msra.mxu0 0
    %162 = vmatprep.subr.bf16.mxu0 0
    %163 = vmatpush2.bf16.msra.mxu0 0
    %164 = vmatprep.subr.bf16.mxu0 0
    %165 = vmatpush2.bf16.msra.mxu0 0
    %166 = vmatprep.subr.bf16.mxu0 0
    %167 = vmatpush2.bf16.msra.mxu0 0
    %168 = vmatprep.mubr.bf16.mxu0 0
    %169 = vmatmul.mubr.bf16.gmra.mxu0 %v131
    %v170 = vpop.f32.mrf.mxu0
    %v171 = vadd.f32 0.0, %v170
    %v172 = vpop.f32.mrf.mxu0
    %v173 = vadd.f32 0.0, %v172
    %v174 = vpop.f32.mrf.mxu0
    %v175 = vadd.f32 0.0, %v174
    %v176 = vpop.f32.mrf.mxu0
    %v177 = vadd.f32 0.0, %v176
    %178 = vmatprep.mubr.bf16.mxu0 0
    %179 = vmatmul.mubr.bf16.gmra.mxu0 %v134
    %v180 = vpop.f32.mrf.mxu0
    %v181 = vadd.f32 0.0, %v180
    %v182 = vpop.f32.mrf.mxu0
    %v183 = vadd.f32 0.0, %v182
    %v184 = vpop.f32.mrf.mxu0
    %v185 = vadd.f32 0.0, %v184
    %v186 = vpop.f32.mrf.mxu0
    %v187 = vadd.f32 0.0, %v186
    %188 = vdwg.mxu0
    %v193 = vlaneseq
    %v194 = vshrl.u32 %v193, 7
    %v195 = vsub.s32 0, %v194
    %v196 = vrot.slane %v87, %v195
    %v197 = vlaneseq
    %v198 = vshrl.u32 %v197, 7
    %v199 = vsub.s32 2, %v198
    %v200 = vrot.slane %v87, %v199
    %v201 = vlaneseq
    %v202 = vshrl.u32 %v201, 7
    %v203 = vsub.s32 0, %v202
    %v204 = vrot.slane %v88, %v203
    %v205 = vlaneseq
    %v206 = vshrl.u32 %v205, 7
    %v207 = vsub.s32 2, %v206
    %v208 = vrot.slane %v88, %v207
    %v209 = vlaneseq
    %v210 = vshrl.u32 %v209, 7
    %v211 = vsub.s32 0, %v210
    %v212 = vrot.slane %v89, %v211
    %v213 = vlaneseq
    %v214 = vshrl.u32 %v213, 7
    %v215 = vsub.s32 2, %v214
    %v216 = vrot.slane %v89, %v215
    %v217 = vlaneseq
    %v218 = vshrl.u32 %v217, 7
    %v219 = vsub.s32 0, %v218
    %v220 = vrot.slane %v90, %v219
    %v221 = vlaneseq
    %v222 = vshrl.u32 %v221, 7
    %v223 = vsub.s32 2, %v222
    %v224 = vrot.slane %v90, %v223
    %v233 = vlaneseq
    %v234 = vshrl.u32 %v233, 7
    %v235 = vsub.s32 0, %v234
    %v236 = vrot.slane %v196, %v235
    %v237 = vlaneseq
    %v238 = vshrl.u32 %v237, 7
    %v239 = vsub.s32 0, %v238
    %v240 = vrot.slane %v200, %v239
    %v241 = vlaneseq
    %v242 = vshrl.u32 %v241, 7
    %v243 = vsub.s32 0, %v242
    %v244 = vrot.slane %v204, %v243
    %v245 = vlaneseq
    %v246 = vshrl.u32 %v245, 7
    %v247 = vsub.s32 0, %v246
    %v248 = vrot.slane %v208, %v247
    %v249 = vlaneseq
    %v250 = vshrl.u32 %v249, 7
    %v251 = vsub.s32 0, %v250
    %v252 = vrot.slane %v212, %v251
    %v253 = vlaneseq
    %v254 = vshrl.u32 %v253, 7
    %v255 = vsub.s32 0, %v254
    %v256 = vrot.slane %v216, %v255
    %v257 = vlaneseq
    %v258 = vshrl.u32 %v257, 7
    %v259 = vsub.s32 0, %v258
    %v260 = vrot.slane %v220, %v259
    %v261 = vlaneseq
    %v262 = vshrl.u32 %v261, 7
    %v263 = vsub.s32 0, %v262
    %v264 = vrot.slane %v224, %v263
    %v265 = vadd.f32 %v171, %v236
    %v266 = vadd.f32 %v173, %v240
    %v267 = vadd.f32 %v175, %v244
    %v268 = vadd.f32 %v177, %v248
    %v269 = vadd.f32 %v181, %v252
    %v270 = vadd.f32 %v183, %v256
    %v271 = vadd.f32 %v185, %v260
    %v272 = vadd.f32 %v187, %v264
    %v273 = vmax.f32 %v265, %v266
    %274 = vmax.xlane.f32.xlu0 %v273
    %v275 = vpop.xlane.xlu0 %274
    %v276 = vmax.f32 %v267, %v268
    %277 = vmax.xlane.f32.xlu0 %v276
    %v278 = vpop.xlane.xlu0 %277
    %v279 = vmax.f32 %v269, %v270
    %280 = vmax.xlane.f32.xlu0 %v279
    %v281 = vpop.xlane.xlu0 %280
    %v282 = vmax.f32 %v271, %v272
    %283 = vmax.xlane.f32.xlu0 %v282
    %v284 = vpop.xlane.xlu0 %283
    %v285 = vld [vmem:[#allocation2] sm:$0xff]
    %v286 = vld [vmem:[#allocation2 + $0x8] sm:$0xff]
    %v287 = vld [vmem:[#allocation2 + $0x10] sm:$0xff]
    %v288 = vld [vmem:[#allocation2 + $0x18] sm:$0xff]
    %v289 = vmax.f32 %v285, %v275
    %v290 = vmax.f32 %v286, %v278
    %v291 = vmax.f32 %v287, %v281
    %v292 = vmax.f32 %v288, %v284
    %v293 = vsub.f32 %v285, %v289
    %v294 = vsub.f32 %v286, %v290
    %v295 = vsub.f32 %v287, %v291
    %v296 = vsub.f32 %v288, %v292
    %v297 = vmul.f32 %v293, 1.442695
    %v298 = vpow.pop %v297
    %v299 = vmul.f32 %v294, 1.442695
    %v300 = vpow.pop %v299
    %v301 = vmul.f32 %v295, 1.442695
    %v302 = vpow.pop %v301
    %v303 = vmul.f32 %v296, 1.442695
    %v304 = vpow.pop %v303
    %306 = vset.pattern.permute.xlu0 0
    %307 = vperm.xlu0 %306, %v289
    %v308 = vpop.permute.xlu0 %307
    %311 = vset.pattern.permute.xlu0 0
    %312 = vperm.xlu0 %311, %v290
    %v313 = vpop.permute.xlu0 %312
    %316 = vset.pattern.permute.xlu0 0
    %317 = vperm.xlu0 %316, %v291
    %v318 = vpop.permute.xlu0 %317
    %321 = vset.pattern.permute.xlu0 0
    %322 = vperm.xlu0 %321, %v292
    %v323 = vpop.permute.xlu0 %322
    %v325 = vsub.f32 %v265, %v308
    %v326 = vsub.f32 %v266, %v308
    %v327 = vsub.f32 %v267, %v313
    %v328 = vsub.f32 %v268, %v313
    %v329 = vsub.f32 %v269, %v318
    %v330 = vsub.f32 %v270, %v318
    %v331 = vsub.f32 %v271, %v323
    %v332 = vsub.f32 %v272, %v323
    %v333 = vmul.f32 %v325, 1.442695
    %v334 = vpow.pop %v333
    %v335 = vmul.f32 %v326, 1.442695
    %v336 = vpow.pop %v335
    %v337 = vmul.f32 %v327, 1.442695
    %v338 = vpow.pop %v337
    %v339 = vmul.f32 %v328, 1.442695
    %v340 = vpow.pop %v339
    %v341 = vmul.f32 %v329, 1.442695
    %v342 = vpow.pop %v341
    %v343 = vmul.f32 %v330, 1.442695
    %v344 = vpow.pop %v343
    %v345 = vmul.f32 %v331, 1.442695
    %v346 = vpow.pop %v345
    %v347 = vmul.f32 %v332, 1.442695
    %v348 = vpow.pop %v347
    %v349 = vld [vmem:[#allocation3] sm:$0xff]
    %v350 = vld [vmem:[#allocation3 + $0x8] sm:$0xff]
    %v351 = vld [vmem:[#allocation3 + $0x10] sm:$0xff]
    %v352 = vld [vmem:[#allocation3 + $0x18] sm:$0xff]
    %v353 = vmul.f32 %v298, %v349
    %v354 = vmul.f32 %v300, %v350
    %v355 = vmul.f32 %v302, %v351
    %v356 = vmul.f32 %v304, %v352
    %v357 = vadd.f32 %v334, %v336
    %358 = vadd.xlane.f32.xlu0 %v357
    %v359 = vpop.xlane.xlu0 %358
    %v360 = vadd.f32 %v338, %v340
    %361 = vadd.xlane.f32.xlu0 %v360
    %v362 = vpop.xlane.xlu0 %361
    %v363 = vadd.f32 %v342, %v344
    %364 = vadd.xlane.f32.xlu0 %v363
    %v365 = vpop.xlane.xlu0 %364
    %v366 = vadd.f32 %v346, %v348
    %367 = vadd.xlane.f32.xlu0 %v366
    %v368 = vpop.xlane.xlu0 %367
    %v369 = vadd.f32 %v353, %v359
    %v370 = vadd.f32 %v354, %v362
    %v371 = vadd.f32 %v355, %v365
    %v372 = vadd.f32 %v356, %v368
    %vm373 = vcmask 7168
    %374 = vst.msk [vmem:[#allocation3] sm:$0xff] %vm373, %v369
    %375 = vst.msk [vmem:[#allocation3 + $0x8] sm:$0xff] %vm373, %v370
    %376 = vst.msk [vmem:[#allocation3 + $0x10] sm:$0xff] %vm373, %v371
    %377 = vst.msk [vmem:[#allocation3 + $0x18] sm:$0xff] %vm373, %v372
    %378 = vst.msk [vmem:[#allocation2] sm:$0xff] %vm373, %v289
    %379 = vst.msk [vmem:[#allocation2 + $0x8] sm:$0xff] %vm373, %v290
    %380 = vst.msk [vmem:[#allocation2 + $0x10] sm:$0xff] %vm373, %v291
    %381 = vst.msk [vmem:[#allocation2 + $0x18] sm:$0xff] %vm373, %v292
    // Predicated region
    $region26: #{tpu_custom_call.1} parent=1 // pred_check
      %p382 = pneg %p70
    $region27: #{tpu_custom_call.1} parent=1 // pred_check_branch
      %384 = sbr.rel (%p382) target = $region29
    $region28: #{tpu_custom_call.1} parent=1 // pred_region
      %v385 = vld [vmem:[#allocation2] sm:$0xff]
      %v386 = vld [vmem:[#allocation2 + $0x8] sm:$0xff]
      %v387 = vld [vmem:[#allocation2 + $0x10] sm:$0xff]
      %v388 = vld [vmem:[#allocation2 + $0x18] sm:$0xff]
      %389 = vst.msk [vmem:[%s3] sm:$0xff] %vm373, %v385
      %390 = vst.msk [vmem:[%s3 + $0x8] sm:$0xff] %vm373, %v386
      %391 = vst.msk [vmem:[%s3 + $0x10] sm:$0xff] %vm373, %v387
      %392 = vst.msk [vmem:[%s3 + $0x18] sm:$0xff] %vm373, %v388
      %v393 = vld [vmem:[#allocation3] sm:$0xff]
      %v394 = vld [vmem:[#allocation3 + $0x8] sm:$0xff]
      %v395 = vld [vmem:[#allocation3 + $0x10] sm:$0xff]
      %v396 = vld [vmem:[#allocation3 + $0x18] sm:$0xff]
      %397 = vst.msk [vmem:[%s4] sm:$0xff] %vm373, %v393
      %398 = vst.msk [vmem:[%s4 + $0x8] sm:$0xff] %vm373, %v394
      %399 = vst.msk [vmem:[%s4 + $0x10] sm:$0xff] %vm373, %v395
      %400 = vst.msk [vmem:[%s4 + $0x18] sm:$0xff] %vm373, %v396
    $region29: #{tpu_custom_call.1} parent=1 // pred_fallthru
      _
    // Predicated region
    $region30: #{tpu_custom_call.1} parent=1 // pred_check
      _
    $region31: #{tpu_custom_call.1} parent=1 // pred_check_branch
      %402 = sbr.rel (0) target = $region33
    $region32: #{tpu_custom_call.1} parent=1 // pred_region
      _
    $region33: #{tpu_custom_call.1} parent=1 // pred_fallthru
      _
    // Predicated region
    $region34: #{tpu_custom_call.1} parent=1 // pred_check
      _
    $region35: #{tpu_custom_call.1} parent=1 // pred_check_branch
      %404 = sbr.rel (0) target = $region37
    $region36: #{tpu_custom_call.1} parent=1 // pred_region
      _
    $region37: #{tpu_custom_call.1} parent=1 // pred_fallthru
      _
    // Predicated region
    $region38: #{tpu_custom_call.1} parent=1 // pred_check
      _
    $region39: #{tpu_custom_call.1} parent=1 // pred_check_branch
      %406 = sbr.rel (0) target = $region41
    $region40: #{tpu_custom_call.1} parent=1 // pred_region
      _
    $region41: #{tpu_custom_call.1} parent=1 // pred_fallthru
      _
    // Predicated region
    $region42: #{tpu_custom_call.1} parent=1 // pred_check
      _
    $region43: #{tpu_custom_call.1} parent=1 // pred_check_branch
      %408 = sbr.rel (0) target = $region45
    $region44: #{tpu_custom_call.1} parent=1 // pred_region
      _
    $region45: #{tpu_custom_call.1} parent=1 // pred_fallthru
      _
    %409 = vsyncpa [#allocation5], 1
    %410 = vsyncpa [#allocation7], 1

</llo_original>
